<compile_context>
chip_gen: v5e
topology: v5e:2x2
jax: 0.10.0
libtpu: 0.0.40
codegen_flags: <defaults>
</compile_context>

<pallas_src>
import numpy as np

import jax
import jax.numpy as jnp
from jax import lax
from jax.experimental import pallas as pl
from jax.experimental.pallas import tpu as pltpu

K_SA = 7      # SpatialAttention kernel size
PAD_SA = 3    # padding for kernel_size=7


def cbam_kernel(x_ref, wc_ref, bnb_ref, wf1_ref, wf2_ref, msa_ref, o_ref, lhs_scr):
    # Blocks: x (nb, C1, HW), out (nb, C2, HW).  Channels on sublanes, HW on lanes.
    nb = x_ref.shape[0]
    hw = x_ref.shape[2]

    # lane-iota select used to stack [avg | max] pooled stats as two columns
    is_max_col = jax.lax.broadcasted_iota(jnp.int32, (1, 2), 1) == 1          # [[F, T]]

    ys = []
    for b in range(nb):                       # static, small -> fully unrolled
        x = x_ref[b].astype(jnp.float32)                                      # (C1, HW)

        # --- 1x1 conv (BN scale folded into wc) + BN bias + Hardswish -------------
        y = jnp.dot(wc_ref[...], x, preferred_element_type=jnp.float32)       # (C2, HW)
        y = y + bnb_ref[...]                                                  # (C2,1) bcast
        y = y * jnp.clip(y + 3.0, 0.0, 6.0) * (1.0 / 6.0)                     # Hardswish

        # --- ChannelAttention: pooled stats -> shared MLP -> sigmoid ---------------
        avg_p = jnp.mean(y, axis=1, keepdims=True)                            # (C2, 1)
        max_p = jnp.max(y, axis=1, keepdims=True)                             # (C2, 1)
        stats = jnp.where(is_max_col, max_p, avg_p)                           # (C2, 2)
        h = jnp.maximum(
            jnp.dot(wf1_ref[...], stats, preferred_element_type=jnp.float32), 0.0)
        o2 = jnp.dot(wf2_ref[...], h, preferred_element_type=jnp.float32)     # (C2, 2)
        ca = jax.nn.sigmoid(jnp.sum(o2, axis=1, keepdims=True))               # (C2, 1)
        y = y * ca                                                            # lane bcast
        ys.append(y)

        # --- SpatialAttention LHS: channel mean/max maps, [avg | max] along lanes --
        lhs_scr[b:b + 1, 0:hw] = jnp.mean(y, axis=0, keepdims=True)           # (1, HW)
        lhs_scr[b:b + 1, hw:2 * hw] = jnp.max(y, axis=0, keepdims=True)       # (1, HW)

    # --- SpatialAttention: ONE batched bf16 MXU matmul for all nb images ----------
    sa = jax.nn.sigmoid(
        jnp.dot(lhs_scr[...].astype(jnp.bfloat16), msa_ref[...],
                preferred_element_type=jnp.float32))                          # (nb, HW)

    for b in range(nb):
        o_ref[b] = (ys[b] * sa[b:b + 1, :]).astype(o_ref.dtype)               # sublane bcast


def _sa_band_matrix(w_sa, H, W):
    """Expand the (2, K, K) SpatialAttention conv weight into a single dense
    (2*HW, HW) matrix M such that [avg_flat | max_flat] @ M realizes the
    zero-padded 'same' cross-correlation (PyTorch Conv2d).  Pure host-side
    weight transform (numpy), executed once at init."""
    w = np.asarray(w_sa, np.float32)
    K = w.shape[-1]
    P = K // 2
    ii, jj = np.meshgrid(np.arange(H), np.arange(W), indexing="ij")
    ci = ii.reshape(-1)                                        # (HW,)
    cj = jj.reshape(-1)
    di = ci[:, None] - ci[None, :] + P                         # i_in - i_out + P
    dj = cj[:, None] - cj[None, :] + P
    valid = (di >= 0) & (di < K) & (dj >= 0) & (dj < K)
    di_c = np.clip(di, 0, K - 1)
    dj_c = np.clip(dj, 0, K - 1)
    m_avg = np.where(valid, w[0][di_c, dj_c], 0.0)
    m_max = np.where(valid, w[1][di_c, dj_c], 0.0)
    return np.concatenate([m_avg, m_max], axis=0).astype(np.float32)   # (2*HW, HW)


def prepare_cbam_params(w_conv, bn_gamma, bn_beta, bn_mean, bn_var, wf1, wf2, w_sa,
                        H, W, eps=1e-5):
    """One-time, host-side weight transforms (call at model init, NOT per forward):
    fold eval-mode BatchNorm into the 1x1 conv, and expand the 7x7 SpatialAttention
    conv into one dense (2*HW, HW) bf16 matrix for a single in-kernel MXU matmul."""
    gamma = np.asarray(bn_gamma, np.float32)
    var = np.asarray(bn_var, np.float32)
    inv_std = gamma / np.sqrt(var + eps)
    w_fold = np.asarray(w_conv, np.float32) * inv_std[:, None]            # (C2, C1)
    bn_bias = np.asarray(bn_beta, np.float32) - np.asarray(bn_mean, np.float32) * inv_std
    m_sa = _sa_band_matrix(w_sa, H, W)                                     # (2*HW, HW)
    return dict(
        wc=jnp.asarray(w_fold, jnp.float32),
        bnb=jnp.asarray(bn_bias.reshape(-1, 1), jnp.float32),
        wf1=jnp.asarray(wf1, jnp.float32),
        wf2=jnp.asarray(wf2, jnp.float32),
        m_sa=jnp.asarray(m_sa, jnp.bfloat16),   # bf16: halves HBM/VMEM, native MXU dtype
        H=H, W=W,
    )


def cbam_forward(x_nchw, params, *, nb=None):
    """x_nchw: (N, C1, H, W); params: output of prepare_cbam_params."""
    N, C1, H, W = x_nchw.shape
    assert (H, W) == (params["H"], params["W"])
    wc, bnb, wf1, wf2, m_sa = (params["wc"], params["bnb"], params["wf1"],
                               params["wf2"], params["m_sa"])
    C2 = wc.shape[0]
    Cr = wf1.shape[0]
    HW = H * W
    assert m_sa.shape == (2 * HW, HW)
    # Lane-dense unmasked stores rely on HW % 128 == 0; re-derive layout otherwise.
    assert HW % 128 == 0, "H*W must be a multiple of 128 for this layout"

    if nb is None:
        # Keep >= 2 grid steps when N >= 2 (v7x: both TensorCores get work); cap the
        # per-step batch so blocks stay small.  Larger nb amortizes step overhead.
        nb = max(1, min(8, -(-N // 2)))
    n_pad = (-N) % nb
    x_flat = x_nchw.reshape(N, C1, HW)                   # no transpose, free reshape
    if n_pad:
        x_flat = jnp.pad(x_flat, ((0, n_pad), (0, 0), (0, 0)))
    Np = N + n_pad

    out_flat = pl.pallas_call(
        cbam_kernel,
        out_shape=jax.ShapeDtypeStruct((Np, C2, HW), jnp.float32),
        grid_spec=pltpu.PrefetchScalarGridSpec(
            num_scalar_prefetch=0,
            grid=(Np // nb,),
            in_specs=[
                pl.BlockSpec((nb, C1, HW), lambda n: (n, 0, 0)),   # x
                pl.BlockSpec((C2, C1), lambda n: (0, 0)),          # folded conv weight
                pl.BlockSpec((C2, 1), lambda n: (0, 0)),           # BN bias
                pl.BlockSpec((Cr, C2), lambda n: (0, 0)),          # CA f1
                pl.BlockSpec((C2, Cr), lambda n: (0, 0)),          # CA f2
                pl.BlockSpec((2 * HW, HW), lambda n: (0, 0)),      # stacked SA matrix (bf16)
            ],
            out_specs=pl.BlockSpec((nb, C2, HW), lambda n: (n, 0, 0)),
            scratch_shapes=[pltpu.VMEM((nb, 2 * HW), jnp.float32)],  # SA matmul LHS
        ),
        compiler_params=pltpu.CompilerParams(
            dimension_semantics=("parallel",)),                    # v7x: 2 TCs share batch
    )(x_flat, wc, bnb, wf1, wf2, m_sa)

    return out_flat[:N].reshape(N, C2, H, W)


def cbam_reference(x_nchw, w_conv, bn_scale, bn_bias, wf1, wf2, w_sa):
    """Pure-JAX f32 reference matching the PyTorch forward (eval-mode BN)."""
    C2 = w_conv.shape[0]
    y = jnp.einsum('nchw,dc->ndhw', x_nchw, w_conv)
    y = y * bn_scale.reshape(1, C2, 1, 1) + bn_bias.reshape(1, C2, 1, 1)
    y = y * jnp.clip(y + 3.0, 0.0, 6.0) / 6.0                      # Hardswish
    avg_p = jnp.mean(y, axis=(2, 3))
    max_p = jnp.max(y, axis=(2, 3))
    mlp = lambda p: jnp.maximum(p @ wf1.T, 0.0) @ wf2.T
    ca = jax.nn.sigmoid(mlp(avg_p) + mlp(max_p))
    y = y * ca[:, :, None, None]
    avg_c = jnp.mean(y, axis=1, keepdims=True)
    max_c = jnp.max(y, axis=1, keepdims=True)
    sp = jnp.concatenate([avg_c, max_c], axis=1)
    conv = lax.conv_general_dilated(
        sp, w_sa.reshape(1, 2, K_SA, K_SA), (1, 1),
        ((PAD_SA, PAD_SA), (PAD_SA, PAD_SA)),
        dimension_numbers=('NCHW', 'OIHW', 'NCHW'))
    sa = jax.nn.sigmoid(conv)
    return y * sa


if __name__ == "__main__":
    # CBAM(c1=4, c2=32) with k=1 default -> 1x1 conv; ratio=16 -> hidden = 2
    N, C1, C2, H, W = 2, 4, 32, 16, 16
    ratio = 16
    Cr = C2 // ratio

    key = jax.random.PRNGKey(0)
    ks = jax.random.split(key, 9)

    x = jax.random.normal(ks[0], (N, C1, H, W), jnp.float32)

    # Conv2d(c1, c2, 1, bias=False) weight in PyTorch (out, in) form
    w_conv = jax.random.normal(ks[1], (C2, C1), jnp.float32) * 0.2
    # BatchNorm2d(c2) eval-mode parameters
    gamma = 1.0 + 0.1 * jax.random.normal(ks[2], (C2,), jnp.float32)
    beta = 0.1 * jax.random.normal(ks[3], (C2,), jnp.float32)
    r_mean = 0.1 * jax.random.normal(ks[4], (C2,), jnp.float32)
    r_var = jax.nn.softplus(jax.random.normal(ks[5], (C2,), jnp.float32)) + 0.5
    eps = 1e-5
    # ChannelAttention 1x1 convs (bias=False) in PyTorch (out, in) form
    wf1 = jax.random.normal(ks[6], (Cr, C2), jnp.float32) * 0.3
    wf2 = jax.random.normal(ks[7], (C2, Cr), jnp.float32) * 0.3
    # SpatialAttention 7x7 conv weight (1, 2, 7, 7) -> (2, 7, 7)
    w_sa = jax.random.normal(ks[8], (2, K_SA, K_SA), jnp.float32) * 0.1

    # One-time weight preparation (BN fold + SA matrix expansion), then forward.
    params = prepare_cbam_params(w_conv, gamma, beta, r_mean, r_var, wf1, wf2, w_sa,
                                 H, W, eps=eps)
    out = jax.block_until_ready(cbam_forward(x, params))

    inv_std = gamma / jnp.sqrt(r_var + eps)
    ref = jax.block_until_ready(
        cbam_reference(x, w_conv, inv_std, beta - r_mean * inv_std, wf1, wf2, w_sa))

    assert out.shape == (N, C2, H, W), out.shape
    err = float(jnp.max(jnp.abs(out - ref)))
    # SpatialAttention weights + LHS are bf16 in the kernel (f32 accumulate), so the
    # tolerance vs. the pure-f32 reference is looser than before.
    assert jnp.allclose(out, ref, atol=1e-2, rtol=1e-2), err
    print("KERNEL_OK")
</pallas_src>

<mosaic_0001>
module attributes {stable_mosaic.version = 11 : i64} {
  func.func @cbam_kernel(%arg0: i32, %arg1: memref<1x4x256xf32, #tpu.memory_space<vmem>>, %arg2: memref<32x4xf32, #tpu.memory_space<vmem>>, %arg3: memref<32x1xf32, #tpu.memory_space<vmem>>, %arg4: memref<2x32xf32, #tpu.memory_space<vmem>>, %arg5: memref<32x2xf32, #tpu.memory_space<vmem>>, %arg6: memref<512x256xbf16, #tpu.memory_space<vmem>>, %arg7: memref<1x32x256xf32, #tpu.memory_space<vmem>>, %arg8: memref<1x512xf32, #tpu.memory_space<vmem>>) attributes {dimension_semantics = [#tpu.dimension_semantics<parallel>], iteration_bounds = array<i64: 2>, scalar_prefetch = 0 : i64, scratch_operands = 1 : i64, tpu.core_type = #tpu.core_type<tc>, window_params = [{transform_indices = @transform_0, window_bounds = array<i64: 1, 4, 256>}, {pipeline_mode = #tpu.pipeline_mode<synchronous>, transform_indices = @transform_1, window_bounds = array<i64: 32, 4>}, {pipeline_mode = #tpu.pipeline_mode<synchronous>, transform_indices = @transform_2, window_bounds = array<i64: 32, 1>}, {pipeline_mode = #tpu.pipeline_mode<synchronous>, transform_indices = @transform_3, window_bounds = array<i64: 2, 32>}, {pipeline_mode = #tpu.pipeline_mode<synchronous>, transform_indices = @transform_4, window_bounds = array<i64: 32, 2>}, {pipeline_mode = #tpu.pipeline_mode<synchronous>, transform_indices = @transform_5, window_bounds = array<i64: 512, 256>}, {transform_indices = @transform_6, window_bounds = array<i64: 1, 32, 256>}]} {
    %0 = tpu.iota {dimensions = array<i32: 1>} : vector<1x2xi32>
    %c1_i32 = arith.constant 1 : i32
    %1 = vector.broadcast %c1_i32 : i32 to vector<1x2xi32>
    %2 = arith.cmpi eq, %0, %1 : vector<1x2xi32>
    %c0 = arith.constant 0 : index
    %c0_0 = arith.constant 0 : index
    %c0_1 = arith.constant 0 : index
    %3 = vector.load %arg1[%c0, %c0_0, %c0_1] : memref<1x4x256xf32, #tpu.memory_space<vmem>>, vector<1x4x256xf32>
    %4 = vector.shape_cast %3 : vector<1x4x256xf32> to vector<4x256xf32>
    %c0_2 = arith.constant 0 : index
    %c0_3 = arith.constant 0 : index
    %5 = vector.load %arg2[%c0_2, %c0_3] : memref<32x4xf32, #tpu.memory_space<vmem>>, vector<32x4xf32>
    %cst = arith.constant dense<0.000000e+00> : vector<32x256xf32>
    %6 = tpu.matmul %5, %4, %cst {dimension_numbers = #tpu.dot_dimension_numbers<[1], [0], [0], [1], [0, 0, 1, 1], [], []>} : vector<32x4xf32>, vector<4x256xf32>, vector<32x256xf32> -> vector<32x256xf32>
    %c0_4 = arith.constant 0 : index
    %c0_5 = arith.constant 0 : index
    %7 = vector.load %arg3[%c0_4, %c0_5] : memref<32x1xf32, #tpu.memory_space<vmem>>, vector<32x1xf32>
    %8 = vector.broadcast %7 : vector<32x1xf32> to vector<32x256xf32>
    %9 = arith.addf %6, %8 : vector<32x256xf32>
    %cst_6 = arith.constant 3.000000e+00 : f32
    %10 = vector.broadcast %cst_6 : f32 to vector<32x256xf32>
    %11 = arith.addf %9, %10 : vector<32x256xf32>
    %cst_7 = arith.constant 0.000000e+00 : f32
    %cst_8 = arith.constant 6.000000e+00 : f32
    %12 = vector.broadcast %cst_7 : f32 to vector<32x256xf32>
    %13 = arith.maximumf %12, %11 : vector<32x256xf32>
    %14 = vector.broadcast %cst_8 : f32 to vector<32x256xf32>
    %15 = arith.minimumf %14, %13 : vector<32x256xf32>
    %16 = arith.mulf %9, %15 : vector<32x256xf32>
    %cst_9 = arith.constant 0.166666672 : f32
    %17 = vector.broadcast %cst_9 : f32 to vector<32x256xf32>
    %18 = arith.mulf %16, %17 : vector<32x256xf32>
    %cst_10 = arith.constant dense<0.000000e+00> : vector<32xf32>
    %19 = vector.multi_reduction <add>, %18, %cst_10 [1] : vector<32x256xf32> to vector<32xf32>
    %20 = vector.shape_cast %19 : vector<32xf32> to vector<32x1xf32>
    %cst_11 = arith.constant 2.560000e+02 : f32
    %21 = vector.broadcast %cst_11 : f32 to vector<32x1xf32>
    %22 = arith.divf %20, %21 : vector<32x1xf32>
    %cst_12 = arith.constant dense<0xFF800000> : vector<32xf32>
    %23 = vector.multi_reduction <maximumf>, %18, %cst_12 [1] : vector<32x256xf32> to vector<32xf32>
    %24 = vector.shape_cast %23 : vector<32xf32> to vector<32x1xf32>
    %25 = vector.shape_cast %2 : vector<1x2xi1> to vector<1x2xi1>
    %26 = vector.broadcast %25 : vector<1x2xi1> to vector<32x2xi1>
    %27 = vector.shape_cast %24 : vector<32x1xf32> to vector<32x1xf32>
    %28 = vector.broadcast %27 : vector<32x1xf32> to vector<32x2xf32>
    %29 = vector.shape_cast %22 : vector<32x1xf32> to vector<32x1xf32>
    %30 = vector.broadcast %29 : vector<32x1xf32> to vector<32x2xf32>
    %31 = arith.select %26, %28, %30 : vector<32x2xi1>, vector<32x2xf32>
    %c0_13 = arith.constant 0 : index
    %c0_14 = arith.constant 0 : index
    %32 = vector.load %arg4[%c0_13, %c0_14] : memref<2x32xf32, #tpu.memory_space<vmem>>, vector<2x32xf32>
    %cst_15 = arith.constant dense<0.000000e+00> : vector<2x2xf32>
    %33 = tpu.matmul %32, %31, %cst_15 {dimension_numbers = #tpu.dot_dimension_numbers<[1], [0], [0], [1], [0, 0, 1, 1], [], []>} : vector<2x32xf32>, vector<32x2xf32>, vector<2x2xf32> -> vector<2x2xf32>
    %cst_16 = arith.constant 0.000000e+00 : f32
    %34 = vector.broadcast %cst_16 : f32 to vector<2x2xf32>
    %35 = arith.maximumf %33, %34 : vector<2x2xf32>
    %c0_17 = arith.constant 0 : index
    %c0_18 = arith.constant 0 : index
    %36 = vector.load %arg5[%c0_17, %c0_18] : memref<32x2xf32, #tpu.memory_space<vmem>>, vector<32x2xf32>
    %cst_19 = arith.constant dense<0.000000e+00> : vector<32x2xf32>
    %37 = tpu.matmul %36, %35, %cst_19 {dimension_numbers = #tpu.dot_dimension_numbers<[1], [0], [0], [1], [0, 0, 1, 1], [], []>} : vector<32x2xf32>, vector<2x2xf32>, vector<32x2xf32> -> vector<32x2xf32>
    %cst_20 = arith.constant dense<0.000000e+00> : vector<32xf32>
    %38 = vector.multi_reduction <add>, %37, %cst_20 [1] : vector<32x2xf32> to vector<32xf32>
    %39 = vector.shape_cast %38 : vector<32xf32> to vector<32x1xf32>
    %40 = arith.negf %39 : vector<32x1xf32>
    %41 = math.exp %40 : vector<32x1xf32>
    %cst_21 = arith.constant 1.000000e+00 : f32
    %42 = vector.broadcast %cst_21 : f32 to vector<32x1xf32>
    %43 = arith.addf %42, %41 : vector<32x1xf32>
    %44 = arith.divf %42, %43 : vector<32x1xf32>
    %45 = vector.broadcast %44 : vector<32x1xf32> to vector<32x256xf32>
    %46 = arith.mulf %18, %45 : vector<32x256xf32>
    %cst_22 = arith.constant dense<0.000000e+00> : vector<256xf32>
    %47 = vector.multi_reduction <add>, %46, %cst_22 [0] : vector<32x256xf32> to vector<256xf32>
    %48 = vector.shape_cast %47 : vector<256xf32> to vector<1x256xf32>
    %cst_23 = arith.constant 3.200000e+01 : f32
    %49 = vector.broadcast %cst_23 : f32 to vector<1x256xf32>
    %50 = arith.divf %48, %49 : vector<1x256xf32>
    %c0_24 = arith.constant 0 : index
    %c0_25 = arith.constant 0 : index
    %51 = vector.load %arg8[%c0_24, %c0_25] : memref<1x512xf32, #tpu.memory_space<vmem>>, vector<1x256xf32>
    tpu.vector_store %arg8[%c0_24, %c0_25], %50 {strides = array<i32>} : memref<1x512xf32, #tpu.memory_space<vmem>>, vector<1x256xf32>,
    %cst_26 = arith.constant dense<0xFF800000> : vector<256xf32>
    %52 = vector.multi_reduction <maximumf>, %46, %cst_26 [0] : vector<32x256xf32> to vector<256xf32>
    %53 = vector.shape_cast %52 : vector<256xf32> to vector<1x256xf32>
    %c0_27 = arith.constant 0 : index
    %c256 = arith.constant 256 : index
    %54 = vector.load %arg8[%c0_27, %c256] : memref<1x512xf32, #tpu.memory_space<vmem>>, vector<1x256xf32>
    tpu.vector_store %arg8[%c0_27, %c256], %53 {strides = array<i32>} : memref<1x512xf32, #tpu.memory_space<vmem>>, vector<1x256xf32>,
    %c0_28 = arith.constant 0 : index
    %c0_29 = arith.constant 0 : index
    %55 = vector.load %arg8[%c0_28, %c0_29] : memref<1x512xf32, #tpu.memory_space<vmem>>, vector<1x512xf32>
    %56 = arith.truncf %55 : vector<1x512xf32> to vector<1x512xbf16>
    %c0_30 = arith.constant 0 : index
    %c0_31 = arith.constant 0 : index
    %57 = vector.load %arg6[%c0_30, %c0_31] : memref<512x256xbf16, #tpu.memory_space<vmem>>, vector<512x256xbf16>
    %cst_32 = arith.constant dense<0.000000e+00> : vector<1x256xf32>
    %58 = tpu.matmul %56, %57, %cst_32 {dimension_numbers = #tpu.dot_dimension_numbers<[1], [0], [0], [1], [0, 0, 1, 1], [], []>} : vector<1x512xbf16>, vector<512x256xbf16>, vector<1x256xf32> -> vector<1x256xf32>
    %59 = arith.negf %58 : vector<1x256xf32>
    %60 = math.exp %59 : vector<1x256xf32>
    %cst_33 = arith.constant 1.000000e+00 : f32
    %61 = vector.broadcast %cst_33 : f32 to vector<1x256xf32>
    %62 = arith.addf %61, %60 : vector<1x256xf32>
    %63 = arith.divf %61, %62 : vector<1x256xf32>
    %64 = vector.broadcast %63 : vector<1x256xf32> to vector<32x256xf32>
    %65 = arith.mulf %46, %64 : vector<32x256xf32>
    %c0_34 = arith.constant 0 : index
    %c0_35 = arith.constant 0 : index
    %c0_36 = arith.constant 0 : index
    %66 = vector.load %arg7[%c0_34, %c0_35, %c0_36] : memref<1x32x256xf32, #tpu.memory_space<vmem>>, vector<1x32x256xf32>
    %67 = vector.shape_cast %66 : vector<1x32x256xf32> to vector<32x256xf32>
    %68 = vector.shape_cast %65 : vector<32x256xf32> to vector<1x32x256xf32>
    tpu.vector_store %arg7[%c0_34, %c0_35, %c0_36], %68 {strides = array<i32>} : memref<1x32x256xf32, #tpu.memory_space<vmem>>, vector<1x32x256xf32>,
    return
  }
  func.func @transform_0(%arg0: i32) -> (i32, i32, i32) {
    %c0_i32 = arith.constant 0 : i32
    %c0_i32_0 = arith.constant 0 : i32
    %c0_i32_1 = arith.constant 0 : i32
    return %arg0, %c0_i32, %c0_i32_0 : i32, i32, i32
  }
  func.func @transform_1(%arg0: i32) -> (i32, i32) {
    %c0_i32 = arith.constant 0 : i32
    %c0_i32_0 = arith.constant 0 : i32
    %c0_i32_1 = arith.constant 0 : i32
    return %c0_i32, %c0_i32_0 : i32, i32
  }
  func.func @transform_2(%arg0: i32) -> (i32, i32) {
    %c0_i32 = arith.constant 0 : i32
    %c0_i32_0 = arith.constant 0 : i32
    %c0_i32_1 = arith.constant 0 : i32
    return %c0_i32, %c0_i32_0 : i32, i32
  }
  func.func @transform_3(%arg0: i32) -> (i32, i32) {
    %c0_i32 = arith.constant 0 : i32
    %c0_i32_0 = arith.constant 0 : i32
    %c0_i32_1 = arith.constant 0 : i32
    return %c0_i32, %c0_i32_0 : i32, i32
  }
  func.func @transform_4(%arg0: i32) -> (i32, i32) {
    %c0_i32 = arith.constant 0 : i32
    %c0_i32_0 = arith.constant 0 : i32
    %c0_i32_1 = arith.constant 0 : i32
    return %c0_i32, %c0_i32_0 : i32, i32
  }
  func.func @transform_5(%arg0: i32) -> (i32, i32) {
    %c0_i32 = arith.constant 0 : i32
    %c0_i32_0 = arith.constant 0 : i32
    %c0_i32_1 = arith.constant 0 : i32
    return %c0_i32, %c0_i32_0 : i32, i32
  }
  func.func @transform_6(%arg0: i32) -> (i32, i32, i32) {
    %c0_i32 = arith.constant 0 : i32
    %c0_i32_0 = arith.constant 0 : i32
    %c0_i32_1 = arith.constant 0 : i32
    return %arg0, %c0_i32, %c0_i32_0 : i32, i32, i32
  }
}

</mosaic_0001>

<llo_original>
// kernel: tpu_custom_call.1
$region0: #{tpu_custom_call.1}
  #allocation0 [shape = 'u32[]', space=smem, size = 0x4, offset = 0x4, fixed_abs, tag = 'smem constant byte address 0x4 - core index']
  #allocation1 [shape = 'u32[72,128]{1,0:T(1,128)}', space=vmem, size = 0x9000, scoped, tag = 'internal scratch']
  #allocation2 [shape = 'f32[1,512]{1,0:T(1,128)}', space=vmem, size = 0x800, scoped, tag = 'scratch operand']
  %s0 = inlined_call_operand.vmem [shape: f32[2,4,256], index: 0, kind: input, shape index: {}]
  %s1 = inlined_call_operand.vmem [shape: f32[32,4], index: 1, kind: input, shape index: {}]
  %s2 = inlined_call_operand.vmem [shape: f32[32,1], index: 2, kind: input, shape index: {}]
  %s3 = inlined_call_operand.vmem [shape: f32[2,32], index: 3, kind: input, shape index: {}]
  %s4 = inlined_call_operand.vmem [shape: f32[32,2], index: 4, kind: input, shape index: {}]
  %s5 = inlined_call_operand.hbm [shape: bf16[512,256], index: 5, kind: input, shape index: {}]
  %s6 = inlined_call_operand.hbm [shape: f32[2,32,256], index: 6, kind: output, shape index: {}]
  %s7 = sld [smem:[#allocation0]]
  $region61: #{tpu_custom_call.1} parent=0
    _
  %s9 = ssub.s32 1, %s7
  %s10 = scalar_select 0, %s9, %s7
  $region1: #{tpu_custom_call.1} parent=0
    #allocation3 [shape = 'u8[262144]{0}', space=vmem, size = 0x40000, scoped, tag = 'input window, operand 5, single buffered']
    #allocation4 [shape = 's32[2]{0}', space=sflag, size = 0x8, scoped, tag = 'scoped memory for tpu_custom_call.1']
    #allocation5 [shape = 's32[2]{0}', space=sflag, size = 0x8, scoped, tag = 'scoped memory for tpu_custom_call.1']
    #allocation6 [shape = 'u8[65536]{0}', space=vmem, size = 0x10000, scoped, tag = 'output window, operand 0']
    %11 = vsyncpa [#allocation4], 0
    %12 = vsyncpa [#allocation5], 0
    %s13 = scalar_lea.sflag [#allocation5], 1
    %14 = vsyncpa %s13, 0
    loop: start=0, step=1, limit=4
    $region2: #{tpu_custom_call.1} parent=1 // loop_pre_header
      _
    $region3: #{tpu_custom_call.1} parent=1 // loop_header
      %s16 = sphi 0, %s20
      %p17 = scmp.ge.s32.totalorder %s16, 4
      %s26 = sphi 0, %s28
      %s29 = sphi 0, %s26
      %s30 = sphi 0, %s29
      %s46 = sphi 0, %s30
      %s50 = sphi 0, %s50
      %s52 = sphi 0, %s50
      %s53 = sphi 0, %s52
      %s67 = sphi 0, %s53
      %s71 = sphi 0, %s71
      %s73 = sphi 0, %s71
      %s74 = sphi 0, %s73
      %s88 = sphi 0, %s74
      %s92 = sphi 0, %s92
      %s94 = sphi 0, %s92
      %s95 = sphi 0, %s94
      %s109 = sphi 0, %s95
      %s113 = sphi 0, %s113
      %s115 = sphi 0, %s113
      %s116 = sphi 0, %s115
      %s130 = sphi 0, %s116
      %s134 = sphi 0, %s134
      %s136 = sphi 0, %s134
      %s137 = sphi 0, %s136
      %s151 = sphi 0, %s137
      %s157 = sphi 0, %s159
      %s160 = sphi 0, %s157
      %s161 = sphi 0, %s160
      %s177 = sphi 0, %s161
    $region4: #{tpu_custom_call.1} parent=1 // loop_header_branch
      %19 = sbr.rel (%p17) target = $region8
    $region5: #{tpu_custom_call.1} parent=1 // loop_body
      %s21 = ssub.s32 %s16, 1
      %s22 = ssub.s32 %s16, 2
      %s23 = sadd.s32 %s16, 1
      %s24 = ssub.s32 %s16, %s23
      %p25 = scmp.eq.s32.totalorder %s24, 0
      %s27 = sadd.s32 %s26, 1
      %s28 = scalar_select %p25, %s26, %s27
      %p31 = pneg %p25
      %p32 = scmp.eq.s32.totalorder %s16, 1
      %p33 = por %p31, %p32
      %p34 = scmp.ne.s32.totalorder %s26, %s29
      %p35 = scmp.eq.s32.totalorder %s16, 0
      %p36 = por %p34, %p35
      %p37 = scmp.ne.s32.totalorder %s26, %s29
      %p38 = scmp.eq.s32.totalorder %s21, 1
      %p39 = por %p37, %p38
      %p40 = scmp.ne.s32.totalorder %s29, %s30
      %p41 = scmp.eq.s32.totalorder %s21, 0
      %p42 = por %p40, %p41
      %p43 = scmp.ne.s32.totalorder %s29, %s30
      %p44 = scmp.eq.s32.totalorder %s22, 1
      %p45 = por %p43, %p44
      %p47 = scmp.ne.s32.totalorder %s30, %s46
      %p48 = scmp.eq.s32.totalorder %s22, 0
      %p49 = por %p47, %p48
      %s51 = sadd.s32 %s50, 1
      %p54 = scmp.eq.s32.totalorder %s16, 1
      %p55 = scmp.ne.s32.totalorder %s50, %s52
      %p56 = scmp.eq.s32.totalorder %s16, 0
      %p57 = por %p55, %p56
      %p58 = scmp.ne.s32.totalorder %s50, %s52
      %p59 = scmp.eq.s32.totalorder %s21, 1
      %p60 = por %p58, %p59
      %p61 = scmp.ne.s32.totalorder %s52, %s53
      %p62 = scmp.eq.s32.totalorder %s21, 0
      %p63 = por %p61, %p62
      %p64 = scmp.ne.s32.totalorder %s52, %s53
      %p65 = scmp.eq.s32.totalorder %s22, 1
      %p66 = por %p64, %p65
      %p68 = scmp.ne.s32.totalorder %s53, %s67
      %p69 = scmp.eq.s32.totalorder %s22, 0
      %p70 = por %p68, %p69
      %s72 = sadd.s32 %s71, 1
      %p75 = scmp.eq.s32.totalorder %s16, 1
      %p76 = scmp.ne.s32.totalorder %s71, %s73
      %p77 = scmp.eq.s32.totalorder %s16, 0
      %p78 = por %p76, %p77
      %p79 = scmp.ne.s32.totalorder %s71, %s73
      %p80 = scmp.eq.s32.totalorder %s21, 1
      %p81 = por %p79, %p80
      %p82 = scmp.ne.s32.totalorder %s73, %s74
      %p83 = scmp.eq.s32.totalorder %s21, 0
      %p84 = por %p82, %p83
      %p85 = scmp.ne.s32.totalorder %s73, %s74
      %p86 = scmp.eq.s32.totalorder %s22, 1
      %p87 = por %p85, %p86
      %p89 = scmp.ne.s32.totalorder %s74, %s88
      %p90 = scmp.eq.s32.totalorder %s22, 0
      %p91 = por %p89, %p90
      %s93 = sadd.s32 %s92, 1
      %p96 = scmp.eq.s32.totalorder %s16, 1
      %p97 = scmp.ne.s32.totalorder %s92, %s94
      %p98 = scmp.eq.s32.totalorder %s16, 0
      %p99 = por %p97, %p98
      %p100 = scmp.ne.s32.totalorder %s92, %s94
      %p101 = scmp.eq.s32.totalorder %s21, 1
      %p102 = por %p100, %p101
      %p103 = scmp.ne.s32.totalorder %s94, %s95
      %p104 = scmp.eq.s32.totalorder %s21, 0
      %p105 = por %p103, %p104
      %p106 = scmp.ne.s32.totalorder %s94, %s95
      %p107 = scmp.eq.s32.totalorder %s22, 1
      %p108 = por %p106, %p107
      %p110 = scmp.ne.s32.totalorder %s95, %s109
      %p111 = scmp.eq.s32.totalorder %s22, 0
      %p112 = por %p110, %p111
      %s114 = sadd.s32 %s113, 1
      %p117 = scmp.eq.s32.totalorder %s16, 1
      %p118 = scmp.ne.s32.totalorder %s113, %s115
      %p119 = scmp.eq.s32.totalorder %s16, 0
      %p120 = por %p118, %p119
      %p121 = scmp.ne.s32.totalorder %s113, %s115
      %p122 = scmp.eq.s32.totalorder %s21, 1
      %p123 = por %p121, %p122
      %p124 = scmp.ne.s32.totalorder %s115, %s116
      %p125 = scmp.eq.s32.totalorder %s21, 0
      %p126 = por %p124, %p125
      %p127 = scmp.ne.s32.totalorder %s115, %s116
      %p128 = scmp.eq.s32.totalorder %s22, 1
      %p129 = por %p127, %p128
      %p131 = scmp.ne.s32.totalorder %s116, %s130
      %p132 = scmp.eq.s32.totalorder %s22, 0
      %p133 = por %p131, %p132
      %s135 = sadd.s32 %s134, 1
      %p138 = scmp.eq.s32.totalorder %s16, 1
      %p139 = scmp.ne.s32.totalorder %s134, %s136
      %p140 = scmp.eq.s32.totalorder %s16, 0
      %p141 = por %p139, %p140
      %p142 = scmp.ne.s32.totalorder %s134, %s136
      %p143 = scmp.eq.s32.totalorder %s21, 1
      %p144 = por %p142, %p143
      %p145 = scmp.ne.s32.totalorder %s136, %s137
      %p146 = scmp.eq.s32.totalorder %s21, 0
      %p147 = por %p145, %p146
      %p148 = scmp.ne.s32.totalorder %s136, %s137
      %p149 = scmp.eq.s32.totalorder %s22, 1
      %p150 = por %p148, %p149
      %p152 = scmp.ne.s32.totalorder %s137, %s151
      %p153 = scmp.eq.s32.totalorder %s22, 0
      %p154 = por %p152, %p153
      %s155 = ssub.s32 %s16, %s23
      %p156 = scmp.eq.s32.totalorder %s155, 0
      %s158 = sadd.s32 %s157, 1
      %s159 = scalar_select %p156, %s157, %s158
      %p162 = pneg %p156
      %p163 = scmp.eq.s32.totalorder %s16, 1
      %p164 = por %p162, %p163
      %p165 = scmp.ne.s32.totalorder %s157, %s160
      %p166 = scmp.eq.s32.totalorder %s16, 0
      %p167 = por %p165, %p166
      %p168 = scmp.ne.s32.totalorder %s157, %s160
      %p169 = scmp.eq.s32.totalorder %s21, 1
      %p170 = por %p168, %p169
      %p171 = scmp.ne.s32.totalorder %s160, %s161
      %p172 = scmp.eq.s32.totalorder %s21, 0
      %p173 = por %p171, %p172
      %p174 = scmp.ne.s32.totalorder %s160, %s161
      %p175 = scmp.eq.s32.totalorder %s22, 1
      %p176 = por %p174, %p175
      %p178 = scmp.ne.s32.totalorder %s161, %s177
      %p179 = scmp.eq.s32.totalorder %s22, 0
      %p180 = por %p178, %p179
      %p181 = scmp.le.s32.totalorder 1, %s16
      %p182 = scmp.lt.s32.totalorder %s16, 3
      %p183 = pnand %p181, %p182
      %p184 = pneg %p183
      // Predicated region
      $region9: #{tpu_custom_call.1} parent=5 // pred_check
        _
      $region10: #{tpu_custom_call.1} parent=5 // pred_check_branch
        %186 = sbr.rel (%p183) target = $region12
      $region11: #{tpu_custom_call.1} parent=5 // pred_region
        %s187 = ssub.s32 %s16, 1
        // Predicated region
        $region13: #{tpu_custom_call.1} parent=11 // pred_check
          %p188 = pneg %p63
        $region14: #{tpu_custom_call.1} parent=11 // pred_check_branch
          %190 = sbr.rel (%p188) target = $region16
        $region15: #{tpu_custom_call.1} parent=11 // pred_region
          _
        $region16: #{tpu_custom_call.1} parent=11 // pred_fallthru
          _
        // Predicated region
        $region17: #{tpu_custom_call.1} parent=11 // pred_check
          %p191 = pneg %p84
        $region18: #{tpu_custom_call.1} parent=11 // pred_check_branch
          %193 = sbr.rel (%p191) target = $region20
        $region19: #{tpu_custom_call.1} parent=11 // pred_region
          _
        $region20: #{tpu_custom_call.1} parent=11 // pred_fallthru
          _
        // Predicated region
        $region21: #{tpu_custom_call.1} parent=11 // pred_check
          %p194 = pneg %p105
        $region22: #{tpu_custom_call.1} parent=11 // pred_check_branch
          %196 = sbr.rel (%p194) target = $region24
        $region23: #{tpu_custom_call.1} parent=11 // pred_region
          _
        $region24: #{tpu_custom_call.1} parent=11 // pred_fallthru
          _
        // Predicated region
        $region25: #{tpu_custom_call.1} parent=11 // pred_check
          %p197 = pneg %p126
        $region26: #{tpu_custom_call.1} parent=11 // pred_check_branch
          %199 = sbr.rel (%p197) target = $region28
        $region27: #{tpu_custom_call.1} parent=11 // pred_region
          _
        $region28: #{tpu_custom_call.1} parent=11 // pred_fallthru
          _
        // Predicated region
        $region29: #{tpu_custom_call.1} parent=11 // pred_check
          %p200 = pneg %p147
        $region30: #{tpu_custom_call.1} parent=11 // pred_check_branch
          %202 = sbr.rel (%p200) target = $region32
        $region31: #{tpu_custom_call.1} parent=11 // pred_region
          %204 = vsyncadd [#allocation4], 0
          %s205 = sshll.u32 %s5, 4
          %s206 = int_to_ptr.hbm [resolvable:$true] %s205
          %s207 = sshll.u32 [#allocation3], 4
          %s208 = int_to_ptr.vmem [resolvable:$true] %s207
          %213 = dma.hbm_to_vmem [thread:$0]  %s206, 8192, %s208, [#allocation4], 128, 128, 8
        $region32: #{tpu_custom_call.1} parent=11 // pred_fallthru
          _
      $region12: #{tpu_custom_call.1} parent=5 // pred_fallthru
        _
      %p214 = scmp.lt.s32.totalorder %s16, 2
      // Predicated region
      $region33: #{tpu_custom_call.1} parent=5 // pred_check
        %p215 = pneg %p214
      $region34: #{tpu_custom_call.1} parent=5 // pred_check_branch
        %217 = sbr.rel (%p215) target = $region36
      $region35: #{tpu_custom_call.1} parent=5 // pred_region
        // Predicated region
        $region37: #{tpu_custom_call.1} parent=35 // pred_check
          %p218 = pneg %p36
        $region38: #{tpu_custom_call.1} parent=35 // pred_check_branch
          %220 = sbr.rel (%p218) target = $region40
        $region39: #{tpu_custom_call.1} parent=35 // pred_region
          %p221 = scmp.lt.s32.totalorder %s16, 1
          %s222 = scalar_select %p221, %s16, 1
          %s223 = smul.addr %s222, 2
          %s224 = smul.addr %s223, 4
          %s225 = scalar_lea.vmem %s0, %s224
        $region40: #{tpu_custom_call.1} parent=35 // pred_fallthru
          _
      $region36: #{tpu_custom_call.1} parent=5 // pred_fallthru
        _
      %p226 = scmp.le.s32.totalorder 1, %s16
      %p227 = scmp.lt.s32.totalorder %s16, 3
      %p228 = pnand %p226, %p227
      %p229 = pneg %p228
      // Predicated region
      $region41: #{tpu_custom_call.1} parent=5 // pred_check
        _
      $region42: #{tpu_custom_call.1} parent=5 // pred_check_branch
        %231 = sbr.rel (%p228) target = $region44
      $region43: #{tpu_custom_call.1} parent=5 // pred_region
        %s232 = ssub.s32 %s16, 1
        // Predicated region
        $region45: #{tpu_custom_call.1} parent=43 // pred_check
          %p233 = pneg %p147
        $region46: #{tpu_custom_call.1} parent=43 // pred_check_branch
          %235 = sbr.rel (%p233) target = $region48
        $region47: #{tpu_custom_call.1} parent=43 // pred_region
          %237 = dma.done [#allocation4], 8192
        $region48: #{tpu_custom_call.1} parent=43 // pred_fallthru
          _
        %p238 = scmp.lt.s32.totalorder %s21, 1
        %s239 = scalar_select %p238, %s21, 1
        %s240 = smul.addr %s239, 2
        %s241 = smul.addr %s240, 4
        %s242 = scalar_lea.vmem %s0, %s241
        %p243 = pneg %p42
        %p244 = pneg %p39
        %p245 = pneg %p63
        %p246 = pneg %p60
        %p247 = pneg %p84
        %p248 = pneg %p81
        %p249 = pneg %p105
        %p250 = pneg %p102
        %p251 = pneg %p126
        %p252 = pneg %p123
        %p253 = pneg %p147
        %p254 = pneg %p144
        %p255 = pneg %p173
        %p256 = pneg %p170
        %s257 = sand.u32 %s160, 1
        %s258 = scalar_lea.sflag [#allocation5], %s257
        %s259 = sand.u32 %s160, 1
        %s260 = smul.addr %s259, 64
        %s261 = scalar_lea.vmem [#allocation6], %s260
        %p262 = scmp.lt.s32.totalorder %s21, 1
        %s263 = scalar_select %p262, %s21, 1
        %s264 = smul.addr %s263, 2
        %s265 = smul.addr %s264, 4
        %s266 = scalar_lea.vmem %s0, %s265
        %v267 = vlaneseq
        %v268 = vand.u32 %v267, 127
        %vm269 = vcmp.eq.s32.totalorder %v268, 1
        %v270 = vld [vmem:[%s266] sm:$0xff]
        %v271 = vld [vmem:[%s1] sm:$0xff]
        %v272 = vld [vmem:[%s1 + $0x8] sm:$0xff]
        %v273 = vld [vmem:[%s1 + $0x10] sm:$0xff]
        %v274 = vld [vmem:[%s1 + $0x18] sm:$0xff]
        %v275 = vld [vmem:[%s2] sm:$0xff]
        %v276 = vld [vmem:[%s2 + $0x8] sm:$0xff]
        %v277 = vld [vmem:[%s2 + $0x10] sm:$0xff]
        %v278 = vld [vmem:[%s2 + $0x18] sm:$0xff]
        %280 = vset.pattern.permute.xlu0 0
        %281 = vperm.xlu0 %280, %v275
        %v282 = vpop.permute.xlu0 %281
        %285 = vset.pattern.permute.xlu0 0
        %286 = vperm.xlu0 %285, %v276
        %v287 = vpop.permute.xlu0 %286
        %290 = vset.pattern.permute.xlu0 0
        %291 = vperm.xlu0 %290, %v277
        %v292 = vpop.permute.xlu0 %291
        %295 = vset.pattern.permute.xlu0 0
        %296 = vperm.xlu0 %295, %v278
        %v297 = vpop.permute.xlu0 %296
        %300 = vst [vmem:[#allocation1] ss:$2 sm:$0xff] %v270
        %v301 = vld.sshfl [vmem:[#allocation1] sm:$0xff pattern:$0x75316420]
        %v302 = vld.sshfl [vmem:[#allocation1 + $0x8] sm:$0xff pattern:$0x75316420]
        %vm303 = vcmask 31744
        %v305 = vsel %vm303, %v271, 0
        %v308 = vsel %vm303, %v272, 0
        %v311 = vsel %vm303, %v273, 0
        %v314 = vsel %vm303, %v274, 0
        %vm316 = vcmask 1043456
        %v317 = vsel %vm316, %v301, 0
        %v319 = vsel %vm316, %v302, 0
        %321 = vmatpush.msra.mxu0 0.0
        %322 = vmatpush.msra.mxu0 0.0
        %323 = vmatpush.msra.mxu0 0.0
        %324 = vmatpush.msra.mxu0 0.0
        %325 = vmatpush.msra.mxu0 0.0
        %326 = vmatpush.msra.mxu0 0.0
        %327 = vmatpush.msra.mxu0 0.0
        %328 = vmatpush.msra.mxu0 0.0
        %329 = vmatpush.msra.mxu0 0.0
        %330 = vmatpush.msra.mxu0 0.0
        %331 = vmatpush.msra.mxu0 0.0
        %332 = vmatpush.msra.mxu0 0.0
        %333 = vmatpush.msra.mxu0 0.0
        %334 = vmatpush.msra.mxu0 0.0
        %335 = vmatpush.msra.mxu0 0.0
        %336 = vmatpush.msra.mxu0 %v317
        %337 = vmatmul.f32.gmra.mxu0 %v305
        %v338 = vpop.f32.mrf.mxu0
        %v339 = vadd.f32 %v282, %v338
        %340 = vmatmul.f32.gmra.mxu0 %v308
        %v341 = vpop.f32.mrf.mxu0
        %v342 = vadd.f32 %v287, %v341
        %343 = vmatmul.f32.gmra.mxu0 %v311
        %v344 = vpop.f32.mrf.mxu0
        %v345 = vadd.f32 %v292, %v344
        %346 = vmatmul.f32.gmra.mxu0 %v314
        %v347 = vpop.f32.mrf.mxu0
        %v348 = vadd.f32 %v297, %v347
        %349 = vdwg.mxu0
        %350 = vmatpush.msra.mxu0 0.0
        %351 = vmatpush.msra.mxu0 0.0
        %352 = vmatpush.msra.mxu0 0.0
        %353 = vmatpush.msra.mxu0 0.0
        %354 = vmatpush.msra.mxu0 0.0
        %355 = vmatpush.msra.mxu0 0.0
        %356 = vmatpush.msra.mxu0 0.0
        %357 = vmatpush.msra.mxu0 0.0
        %358 = vmatpush.msra.mxu0 0.0
        %359 = vmatpush.msra.mxu0 0.0
        %360 = vmatpush.msra.mxu0 0.0
        %361 = vmatpush.msra.mxu0 0.0
        %362 = vmatpush.msra.mxu0 0.0
        %363 = vmatpush.msra.mxu0 0.0
        %364 = vmatpush.msra.mxu0 0.0
        %365 = vmatpush.msra.mxu0 %v319
        %366 = vmatmul.f32.gmra.mxu0 %v305
        %v367 = vpop.f32.mrf.mxu0
        %v368 = vadd.f32 %v282, %v367
        %369 = vmatmul.f32.gmra.mxu0 %v308
        %v370 = vpop.f32.mrf.mxu0
        %v371 = vadd.f32 %v287, %v370
        %372 = vmatmul.f32.gmra.mxu0 %v311
        %v373 = vpop.f32.mrf.mxu0
        %v374 = vadd.f32 %v292, %v373
        %375 = vmatmul.f32.gmra.mxu0 %v314
        %v376 = vpop.f32.mrf.mxu0
        %v377 = vadd.f32 %v297, %v376
        %378 = vdwg.mxu0
        %v379 = vadd.f32 %v339, 3.0
        %v380 = vadd.f32 %v368, 3.0
        %v381 = vadd.f32 %v342, 3.0
        %v382 = vadd.f32 %v371, 3.0
        %v383 = vadd.f32 %v345, 3.0
        %v384 = vadd.f32 %v374, 3.0
        %v385 = vadd.f32 %v348, 3.0
        %v386 = vadd.f32 %v377, 3.0
        %v387 = vmax.f32 %v379, 0.0
        %v388 = vmax.f32 %v380, 0.0
        %v389 = vmax.f32 %v381, 0.0
        %v390 = vmax.f32 %v382, 0.0
        %v391 = vmax.f32 %v383, 0.0
        %v392 = vmax.f32 %v384, 0.0
        %v393 = vmax.f32 %v385, 0.0
        %v394 = vmax.f32 %v386, 0.0
        %v395 = vmin.f32 %v387, 6.0
        %v396 = vmin.f32 %v388, 6.0
        %v397 = vmin.f32 %v389, 6.0
        %v398 = vmin.f32 %v390, 6.0
        %v399 = vmin.f32 %v391, 6.0
        %v400 = vmin.f32 %v392, 6.0
        %v401 = vmin.f32 %v393, 6.0
        %v402 = vmin.f32 %v394, 6.0
        %v403 = vmul.f32 %v339, %v395
        %v404 = vmul.f32 %v368, %v396
        %v405 = vmul.f32 %v342, %v397
        %v406 = vmul.f32 %v371, %v398
        %v407 = vmul.f32 %v345, %v399
        %v408 = vmul.f32 %v374, %v400
        %v409 = vmul.f32 %v348, %v401
        %v410 = vmul.f32 %v377, %v402
        %v411 = vmul.f32 %v403, 0.16666667
        %v412 = vmul.f32 %v404, 0.16666667
        %v413 = vmul.f32 %v405, 0.16666667
        %v414 = vmul.f32 %v406, 0.16666667
        %v415 = vmul.f32 %v407, 0.16666667
        %v416 = vmul.f32 %v408, 0.16666667
        %v417 = vmul.f32 %v409, 0.16666667
        %v418 = vmul.f32 %v410, 0.16666667
        %v419 = vadd.f32 %v411, %v412
        %420 = vadd.xlane.f32.xlu0 %v419
        %v421 = vpop.xlane.xlu0 %420
        %v422 = vadd.f32 %v413, %v414
        %423 = vadd.xlane.f32.xlu0 %v422
        %v424 = vpop.xlane.xlu0 %423
        %v425 = vadd.f32 %v415, %v416
        %426 = vadd.xlane.f32.xlu0 %v425
        %v427 = vpop.xlane.xlu0 %426
        %v428 = vadd.f32 %v417, %v418
        %429 = vadd.xlane.f32.xlu0 %v428
        %v430 = vpop.xlane.xlu0 %429
        %v431 = vrcp.pop 256.0
        %v432 = vmul.f32 256.0, %v431
        %v433 = vsub.f32 1.0, %v432
        %v434 = vmul.f32 %v431, %v433
        %v435 = vadd.f32 %v431, %v434
        %vm436 = vweird.f32 %v431
        %v437 = vsel %vm436, %v431, %v435
        %v438 = vmul.f32 %v421, %v437
        %v439 = vmul.f32 %v424, %v437
        %v440 = vmul.f32 %v427, %v437
        %v441 = vmul.f32 %v430, %v437
        %v442 = vmax.f32 %v411, %v412
        %443 = vmax.xlane.f32.xlu0 %v442
        %v444 = vpop.xlane.xlu0 %443
        %v445 = vmax.f32 %v413, %v414
        %446 = vmax.xlane.f32.xlu0 %v445
        %v447 = vpop.xlane.xlu0 %446
        %v448 = vmax.f32 %v415, %v416
        %449 = vmax.xlane.f32.xlu0 %v448
        %v450 = vpop.xlane.xlu0 %449
        %v451 = vmax.f32 %v417, %v418
        %452 = vmax.xlane.f32.xlu0 %v451
        %v453 = vpop.xlane.xlu0 %452
        %v454 = vsel %vm269, 1, 0
        %vm455 = vcmp.eq.s32.totalorder %v454, 1
        %v456 = vsel %vm455, %v444, %v438
        %v457 = vsel %vm455, %v447, %v439
        %v458 = vsel %vm455, %v450, %v440
        %v459 = vsel %vm455, %v453, %v441
        %v460 = vld [vmem:[%s3] sm:$0x3]
        %vm461 = vcmask 261120
        %v463 = vsel %vm461, %v460, 0
        %465 = vmatpush.msra.mxu0 0.0
        %466 = vmatpush.msra.mxu0 0.0
        %467 = vmatpush.msra.mxu0 0.0
        %468 = vmatpush.msra.mxu0 0.0
        %469 = vmatpush.msra.mxu0 0.0
        %470 = vmatpush.msra.mxu0 0.0
        %471 = vmatpush.msra.mxu0 0.0
        %472 = vmatpush.msra.mxu0 0.0
        %473 = vmatpush.msra.mxu0 0.0
        %474 = vmatpush.msra.mxu0 0.0
        %475 = vmatpush.msra.mxu0 0.0
        %476 = vmatpush.msra.mxu0 0.0
        %477 = vmatpush.msra.mxu0 %v459
        %478 = vmatpush.msra.mxu0 %v458
        %479 = vmatpush.msra.mxu0 %v457
        %480 = vmatpush.msra.mxu0 %v456
        %481 = vmatmul.f32.gmra.mxu0 %v463
        %v482 = vpop.f32.mrf.mxu0
        %v483 = vadd.f32 0.0, %v482
        %484 = vdwg.mxu0
        %v485 = vmax.f32 %v483, 0.0
        %v486 = vld [vmem:[%s4] sm:$0xff]
        %v487 = vld [vmem:[%s4 + $0x8] sm:$0xff]
        %v488 = vld [vmem:[%s4 + $0x10] sm:$0xff]
        %v489 = vld [vmem:[%s4 + $0x18] sm:$0xff]
        %vm490 = vcmask 15360
        %v492 = vsel %vm490, %v486, 0
        %v495 = vsel %vm490, %v487, 0
        %v498 = vsel %vm490, %v488, 0
        %v501 = vsel %vm490, %v489, 0
        %vm503 = vcmask 1041408
        %v505 = vsel %vm503, %v485, 0
        %507 = vmatpush.msra.mxu0 0.0
        %508 = vmatpush.msra.mxu0 0.0
        %509 = vmatpush.msra.mxu0 0.0
        %510 = vmatpush.msra.mxu0 0.0
        %511 = vmatpush.msra.mxu0 0.0
        %512 = vmatpush.msra.mxu0 0.0
        %513 = vmatpush.msra.mxu0 0.0
        %514 = vmatpush.msra.mxu0 0.0
        %515 = vmatpush.msra.mxu0 0.0
        %516 = vmatpush.msra.mxu0 0.0
        %517 = vmatpush.msra.mxu0 0.0
        %518 = vmatpush.msra.mxu0 0.0
        %519 = vmatpush.msra.mxu0 0.0
        %520 = vmatpush.msra.mxu0 0.0
        %521 = vmatpush.msra.mxu0 0.0
        %522 = vmatpush.msra.mxu0 %v505
        %523 = vmatmul.f32.gmra.mxu0 %v492
        %v524 = vpop.f32.mrf.mxu0
        %v525 = vadd.f32 0.0, %v524
        %526 = vmatmul.f32.gmra.mxu0 %v495
        %v527 = vpop.f32.mrf.mxu0
        %v528 = vadd.f32 0.0, %v527
        %529 = vmatmul.f32.gmra.mxu0 %v498
        %v530 = vpop.f32.mrf.mxu0
        %v531 = vadd.f32 0.0, %v530
        %532 = vmatmul.f32.gmra.mxu0 %v501
        %v533 = vpop.f32.mrf.mxu0
        %v534 = vadd.f32 0.0, %v533
        %535 = vdwg.mxu0
        %v536 = vsel %vm490, %v525, 0.0
        %537 = vadd.xlane.f32.xlu0 %v536
        %v538 = vpop.xlane.xlu0 %537
        %v539 = vsel %vm490, %v528, 0.0
        %540 = vadd.xlane.f32.xlu0 %v539
        %v541 = vpop.xlane.xlu0 %540
        %v542 = vsel %vm490, %v531, 0.0
        %543 = vadd.xlane.f32.xlu0 %v542
        %v544 = vpop.xlane.xlu0 %543
        %v545 = vsel %vm490, %v534, 0.0
        %546 = vadd.xlane.f32.xlu0 %v545
        %v547 = vpop.xlane.xlu0 %546
        %v548 = vxor.u32 %v538, 2147483648
        %v549 = vxor.u32 %v541, 2147483648
        %v550 = vxor.u32 %v544, 2147483648
        %v551 = vxor.u32 %v547, 2147483648
        %v552 = vmul.f32 %v548, 1.442695
        %v553 = vpow.pop %v552
        %v554 = vmul.f32 %v549, 1.442695
        %v555 = vpow.pop %v554
        %v556 = vmul.f32 %v550, 1.442695
        %v557 = vpow.pop %v556
        %v558 = vmul.f32 %v551, 1.442695
        %v559 = vpow.pop %v558
        %v560 = vadd.f32 %v553, 1.0
        %v561 = vadd.f32 %v555, 1.0
        %v562 = vadd.f32 %v557, 1.0
        %v563 = vadd.f32 %v559, 1.0
        %v564 = vrcp.pop %v560
        %v565 = vmul.f32 %v560, %v564
        %v566 = vsub.f32 1.0, %v565
        %v567 = vmul.f32 %v564, %v566
        %v568 = vadd.f32 %v564, %v567
        %vm569 = vweird.f32 %v560
        %vm570 = vweird.f32 %v564
        %vm571 = vmor %vm569, %vm570
        %v572 = vsel %vm571, %v564, %v568
        %v573 = vand.u32 2147483647, %v560
        %vm574 = vcmp.eq.f32.partialorder %v573, 8.507059e+37
        %v575 = vand.u32 %v560, 2147483648
        %v576 = vor.u32 1.1754944e-38, %v575
        %v577 = vsel %vm574, %v576, %v572
        %v578 = vmul.f32 1.0, %v577
        %v579 = vrcp.pop %v561
        %v580 = vmul.f32 %v561, %v579
        %v581 = vsub.f32 1.0, %v580
        %v582 = vmul.f32 %v579, %v581
        %v583 = vadd.f32 %v579, %v582
        %vm584 = vweird.f32 %v561
        %vm585 = vweird.f32 %v579
        %vm586 = vmor %vm584, %vm585
        %v587 = vsel %vm586, %v579, %v583
        %v588 = vand.u32 2147483647, %v561
        %vm589 = vcmp.eq.f32.partialorder %v588, 8.507059e+37
        %v590 = vand.u32 %v561, 2147483648
        %v591 = vor.u32 1.1754944e-38, %v590
        %v592 = vsel %vm589, %v591, %v587
        %v593 = vmul.f32 1.0, %v592
        %v594 = vrcp.pop %v562
        %v595 = vmul.f32 %v562, %v594
        %v596 = vsub.f32 1.0, %v595
        %v597 = vmul.f32 %v594, %v596
        %v598 = vadd.f32 %v594, %v597
        %vm599 = vweird.f32 %v562
        %vm600 = vweird.f32 %v594
        %vm601 = vmor %vm599, %vm600
        %v602 = vsel %vm601, %v594, %v598
        %v603 = vand.u32 2147483647, %v562
        %vm604 = vcmp.eq.f32.partialorder %v603, 8.507059e+37
        %v605 = vand.u32 %v562, 2147483648
        %v606 = vor.u32 1.1754944e-38, %v605
        %v607 = vsel %vm604, %v606, %v602
        %v608 = vmul.f32 1.0, %v607
        %v609 = vrcp.pop %v563
        %v610 = vmul.f32 %v563, %v609
        %v611 = vsub.f32 1.0, %v610
        %v612 = vmul.f32 %v609, %v611
        %v613 = vadd.f32 %v609, %v612
        %vm614 = vweird.f32 %v563
        %vm615 = vweird.f32 %v609
        %vm616 = vmor %vm614, %vm615
        %v617 = vsel %vm616, %v609, %v613
        %v618 = vand.u32 2147483647, %v563
        %vm619 = vcmp.eq.f32.partialorder %v618, 8.507059e+37
        %v620 = vand.u32 %v563, 2147483648
        %v621 = vor.u32 1.1754944e-38, %v620
        %v622 = vsel %vm619, %v621, %v617
        %v623 = vmul.f32 1.0, %v622
        %v624 = vmul.f32 %v411, %v578
        %v625 = vmul.f32 %v412, %v578
        %v626 = vmul.f32 %v413, %v593
        %v627 = vmul.f32 %v414, %v593
        %v628 = vmul.f32 %v415, %v608
        %v629 = vmul.f32 %v416, %v608
        %v630 = vmul.f32 %v417, %v623
        %v631 = vmul.f32 %v418, %v623
        %v632 = vadd.f32 %v624, %v626
        %v633 = vadd.f32 %v632, %v628
        %v634 = vadd.f32 %v633, %v630
        %v635 = vrot.slane %v634, 4
        %v636 = vadd.f32 %v634, %v635
        %v637 = vrot.slane %v636, 2
        %v638 = vadd.f32 %v636, %v637
        %v639 = vrot.slane %v638, 1
        %v640 = vadd.f32 %v638, %v639
        %v641 = vadd.f32 %v625, %v627
        %v642 = vadd.f32 %v641, %v629
        %v643 = vadd.f32 %v642, %v631
        %v644 = vrot.slane %v643, 4
        %v645 = vadd.f32 %v643, %v644
        %v646 = vrot.slane %v645, 2
        %v647 = vadd.f32 %v645, %v646
        %v648 = vrot.slane %v647, 1
        %v649 = vadd.f32 %v647, %v648
        %v650 = vrcp.pop 32.0
        %v651 = vmul.f32 32.0, %v650
        %v652 = vsub.f32 1.0, %v651
        %v653 = vmul.f32 %v650, %v652
        %v654 = vadd.f32 %v650, %v653
        %vm655 = vweird.f32 %v650
        %v656 = vsel %vm655, %v650, %v654
        %v657 = vmul.f32 %v640, %v656
        %v658 = vmul.f32 %v649, %v656
        %v661 = vrot.slane %v658, 7
        %vm662 = vcmask 1040384
        %v663 = vsel %vm662, %v657, %v661
        %v665 = vlaneseq
        %vm666 = vcmp.ge.s32.totalorder %v665, 0
        %vm667 = vcmp.lt.s32.totalorder %v665, 256
        %vm668 = vmand %vm666, %vm667
        %669 = vst.msk [vmem:[#allocation2] sm:$0x3] %vm668, %v663
        %v670 = vmax.f32 %v624, %v628
        %v671 = vmax.f32 %v626, %v630
        %v672 = vmax.f32 %v670, %v671
        %v673 = vrot.slane %v672, 4
        %v674 = vmax.f32 %v672, %v673
        %v675 = vrot.slane %v674, 2
        %v676 = vmax.f32 %v674, %v675
        %v677 = vrot.slane %v676, 1
        %v678 = vmax.f32 %v676, %v677
        %v679 = vmax.f32 %v625, %v629
        %v680 = vmax.f32 %v627, %v631
        %v681 = vmax.f32 %v679, %v680
        %v682 = vrot.slane %v681, 4
        %v683 = vmax.f32 %v681, %v682
        %v684 = vrot.slane %v683, 2
        %v685 = vmax.f32 %v683, %v684
        %v686 = vrot.slane %v685, 1
        %v687 = vmax.f32 %v685, %v686
        %v690 = vrot.slane %v687, 7
        %v691 = vsel %vm662, %v678, %v690
        %693 = vst.msk [vmem:[#allocation2 + $0x2] sm:$0x3] %vm668, %v691
        %v694 = vld [vmem:[#allocation2] sm:$0xf]
        %v696 = vperm.slane %v694, 0
        %v697 = vperm.slane %v694, 1
        %v698 = vperm.slane %v694, 2
        %v699 = vperm.slane %v694, 3
        %v704 = vpack.c.bf16 %v696, %v696
        %v705 = vpack.c.bf16 %v697, %v697
        %v706 = vpack.c.bf16 %v698, %v698
        %v707 = vpack.c.bf16 %v699, %v699
        %v708 = vld [vmem:[#allocation3] sm:$0xff]
        %v709 = vld [vmem:[#allocation3 + $0x8] sm:$0xff]
        %v710 = vld [vmem:[#allocation3 + $0x10] sm:$0xff]
        %v711 = vld [vmem:[#allocation3 + $0x18] sm:$0xff]
        %v712 = vld [vmem:[#allocation3 + $0x20] sm:$0xff]
        %v713 = vld [vmem:[#allocation3 + $0x28] sm:$0xff]
        %v714 = vld [vmem:[#allocation3 + $0x30] sm:$0xff]
        %v715 = vld [vmem:[#allocation3 + $0x38] sm:$0xff]
        %v716 = vld [vmem:[#allocation3 + $0x40] sm:$0xff]
        %v717 = vld [vmem:[#allocation3 + $0x48] sm:$0xff]
        %v718 = vld [vmem:[#allocation3 + $0x50] sm:$0xff]
        %v719 = vld [vmem:[#allocation3 + $0x58] sm:$0xff]
        %v720 = vld [vmem:[#allocation3 + $0x60] sm:$0xff]
        %v721 = vld [vmem:[#allocation3 + $0x68] sm:$0xff]
        %v722 = vld [vmem:[#allocation3 + $0x70] sm:$0xff]
        %v723 = vld [vmem:[#allocation3 + $0x78] sm:$0xff]
        %v724 = vld [vmem:[#allocation3 + $0x80] sm:$0xff]
        %v725 = vld [vmem:[#allocation3 + $0x88] sm:$0xff]
        %v726 = vld [vmem:[#allocation3 + $0x90] sm:$0xff]
        %v727 = vld [vmem:[#allocation3 + $0x98] sm:$0xff]
        %v728 = vld [vmem:[#allocation3 + $0xa0] sm:$0xff]
        %v729 = vld [vmem:[#allocation3 + $0xa8] sm:$0xff]
        %v730 = vld [vmem:[#allocation3 + $0xb0] sm:$0xff]
        %v731 = vld [vmem:[#allocation3 + $0xb8] sm:$0xff]
        %v732 = vld [vmem:[#allocation3 + $0xc0] sm:$0xff]
        %v733 = vld [vmem:[#allocation3 + $0xc8] sm:$0xff]
        %v734 = vld [vmem:[#allocation3 + $0xd0] sm:$0xff]
        %v735 = vld [vmem:[#allocation3 + $0xd8] sm:$0xff]
        %v736 = vld [vmem:[#allocation3 + $0xe0] sm:$0xff]
        %v737 = vld [vmem:[#allocation3 + $0xe8] sm:$0xff]
        %v738 = vld [vmem:[#allocation3 + $0xf0] sm:$0xff]
        %v739 = vld [vmem:[#allocation3 + $0xf8] sm:$0xff]
        %v740 = vld [vmem:[#allocation3 + $0x100] sm:$0xff]
        %v741 = vld [vmem:[#allocation3 + $0x108] sm:$0xff]
        %v742 = vld [vmem:[#allocation3 + $0x110] sm:$0xff]
        %v743 = vld [vmem:[#allocation3 + $0x118] sm:$0xff]
        %v744 = vld [vmem:[#allocation3 + $0x120] sm:$0xff]
        %v745 = vld [vmem:[#allocation3 + $0x128] sm:$0xff]
        %v746 = vld [vmem:[#allocation3 + $0x130] sm:$0xff]
        %v747 = vld [vmem:[#allocation3 + $0x138] sm:$0xff]
        %v748 = vld [vmem:[#allocation3 + $0x140] sm:$0xff]
        %v749 = vld [vmem:[#allocation3 + $0x148] sm:$0xff]
        %v750 = vld [vmem:[#allocation3 + $0x150] sm:$0xff]
        %v751 = vld [vmem:[#allocation3 + $0x158] sm:$0xff]
        %v752 = vld [vmem:[#allocation3 + $0x160] sm:$0xff]
        %v753 = vld [vmem:[#allocation3 + $0x168] sm:$0xff]
        %v754 = vld [vmem:[#allocation3 + $0x170] sm:$0xff]
        %v755 = vld [vmem:[#allocation3 + $0x178] sm:$0xff]
        %v756 = vld [vmem:[#allocation3 + $0x180] sm:$0xff]
        %v757 = vld [vmem:[#allocation3 + $0x188] sm:$0xff]
        %v758 = vld [vmem:[#allocation3 + $0x190] sm:$0xff]
        %v759 = vld [vmem:[#allocation3 + $0x198] sm:$0xff]
        %v760 = vld [vmem:[#allocation3 + $0x1a0] sm:$0xff]
        %v761 = vld [vmem:[#allocation3 + $0x1a8] sm:$0xff]
        %v762 = vld [vmem:[#allocation3 + $0x1b0] sm:$0xff]
        %v763 = vld [vmem:[#allocation3 + $0x1b8] sm:$0xff]
        %v764 = vld [vmem:[#allocation3 + $0x1c0] sm:$0xff]
        %v765 = vld [vmem:[#allocation3 + $0x1c8] sm:$0xff]
        %v766 = vld [vmem:[#allocation3 + $0x1d0] sm:$0xff]
        %v767 = vld [vmem:[#allocation3 + $0x1d8] sm:$0xff]
        %v768 = vld [vmem:[#allocation3 + $0x1e0] sm:$0xff]
        %v769 = vld [vmem:[#allocation3 + $0x1e8] sm:$0xff]
        %v770 = vld [vmem:[#allocation3 + $0x1f0] sm:$0xff]
        %v771 = vld [vmem:[#allocation3 + $0x1f8] sm:$0xff]
        %v836 = vunpack.c.l.b16 %v708
        %v837 = vunpack.c.h.b16 %v708
        %v838 = vunpack.c.l.b16 %v709
        %v839 = vunpack.c.h.b16 %v709
        %v840 = vunpack.c.l.b16 %v710
        %v841 = vunpack.c.h.b16 %v710
        %v842 = vunpack.c.l.b16 %v711
        %v843 = vunpack.c.h.b16 %v711
        %v844 = vunpack.c.l.b16 %v712
        %v845 = vunpack.c.h.b16 %v712
        %v846 = vunpack.c.l.b16 %v713
        %v847 = vunpack.c.h.b16 %v713
        %v848 = vunpack.c.l.b16 %v714
        %v849 = vunpack.c.h.b16 %v714
        %v850 = vunpack.c.l.b16 %v715
        %v851 = vunpack.c.h.b16 %v715
        %v852 = vunpack.c.l.b16 %v716
        %v853 = vunpack.c.h.b16 %v716
        %v854 = vunpack.c.l.b16 %v717
        %v855 = vunpack.c.h.b16 %v717
        %v856 = vunpack.c.l.b16 %v718
        %v857 = vunpack.c.h.b16 %v718
        %v858 = vunpack.c.l.b16 %v719
        %v859 = vunpack.c.h.b16 %v719
        %v860 = vunpack.c.l.b16 %v720
        %v861 = vunpack.c.h.b16 %v720
        %v862 = vunpack.c.l.b16 %v721
        %v863 = vunpack.c.h.b16 %v721
        %v864 = vunpack.c.l.b16 %v722
        %v865 = vunpack.c.h.b16 %v722
        %v866 = vunpack.c.l.b16 %v723
        %v867 = vunpack.c.h.b16 %v723
        %v868 = vunpack.c.l.b16 %v724
        %v869 = vunpack.c.h.b16 %v724
        %v870 = vunpack.c.l.b16 %v725
        %v871 = vunpack.c.h.b16 %v725
        %v872 = vunpack.c.l.b16 %v726
        %v873 = vunpack.c.h.b16 %v726
        %v874 = vunpack.c.l.b16 %v727
        %v875 = vunpack.c.h.b16 %v727
        %v876 = vunpack.c.l.b16 %v728
        %v877 = vunpack.c.h.b16 %v728
        %v878 = vunpack.c.l.b16 %v729
        %v879 = vunpack.c.h.b16 %v729
        %v880 = vunpack.c.l.b16 %v730
        %v881 = vunpack.c.h.b16 %v730
        %v882 = vunpack.c.l.b16 %v731
        %v883 = vunpack.c.h.b16 %v731
        %v884 = vunpack.c.l.b16 %v732
        %v885 = vunpack.c.h.b16 %v732
        %v886 = vunpack.c.l.b16 %v733
        %v887 = vunpack.c.h.b16 %v733
        %v888 = vunpack.c.l.b16 %v734
        %v889 = vunpack.c.h.b16 %v734
        %v890 = vunpack.c.l.b16 %v735
        %v891 = vunpack.c.h.b16 %v735
        %v892 = vunpack.c.l.b16 %v736
        %v893 = vunpack.c.h.b16 %v736
        %v894 = vunpack.c.l.b16 %v737
        %v895 = vunpack.c.h.b16 %v737
        %v896 = vunpack.c.l.b16 %v738
        %v897 = vunpack.c.h.b16 %v738
        %v898 = vunpack.c.l.b16 %v739
        %v899 = vunpack.c.h.b16 %v739
        %v900 = vunpack.c.l.b16 %v740
        %v901 = vunpack.c.h.b16 %v740
        %v902 = vunpack.c.l.b16 %v741
        %v903 = vunpack.c.h.b16 %v741
        %v904 = vunpack.c.l.b16 %v742
        %v905 = vunpack.c.h.b16 %v742
        %v906 = vunpack.c.l.b16 %v743
        %v907 = vunpack.c.h.b16 %v743
        %v908 = vunpack.c.l.b16 %v744
        %v909 = vunpack.c.h.b16 %v744
        %v910 = vunpack.c.l.b16 %v745
        %v911 = vunpack.c.h.b16 %v745
        %v912 = vunpack.c.l.b16 %v746
        %v913 = vunpack.c.h.b16 %v746
        %v914 = vunpack.c.l.b16 %v747
        %v915 = vunpack.c.h.b16 %v747
        %v916 = vunpack.c.l.b16 %v748
        %v917 = vunpack.c.h.b16 %v748
        %v918 = vunpack.c.l.b16 %v749
        %v919 = vunpack.c.h.b16 %v749
        %v920 = vunpack.c.l.b16 %v750
        %v921 = vunpack.c.h.b16 %v750
        %v922 = vunpack.c.l.b16 %v751
        %v923 = vunpack.c.h.b16 %v751
        %v924 = vunpack.c.l.b16 %v752
        %v925 = vunpack.c.h.b16 %v752
        %v926 = vunpack.c.l.b16 %v753
        %v927 = vunpack.c.h.b16 %v753
        %v928 = vunpack.c.l.b16 %v754
        %v929 = vunpack.c.h.b16 %v754
        %v930 = vunpack.c.l.b16 %v755
        %v931 = vunpack.c.h.b16 %v755
        %v932 = vunpack.c.l.b16 %v756
        %v933 = vunpack.c.h.b16 %v756
        %v934 = vunpack.c.l.b16 %v757
        %v935 = vunpack.c.h.b16 %v757
        %v936 = vunpack.c.l.b16 %v758
        %v937 = vunpack.c.h.b16 %v758
        %v938 = vunpack.c.l.b16 %v759
        %v939 = vunpack.c.h.b16 %v759
        %v940 = vunpack.c.l.b16 %v760
        %v941 = vunpack.c.h.b16 %v760
        %v942 = vunpack.c.l.b16 %v761
        %v943 = vunpack.c.h.b16 %v761
        %v944 = vunpack.c.l.b16 %v762
        %v945 = vunpack.c.h.b16 %v762
        %v946 = vunpack.c.l.b16 %v763
        %v947 = vunpack.c.h.b16 %v763
        %v948 = vunpack.c.l.b16 %v764
        %v949 = vunpack.c.h.b16 %v764
        %v950 = vunpack.c.l.b16 %v765
        %v951 = vunpack.c.h.b16 %v765
        %v952 = vunpack.c.l.b16 %v766
        %v953 = vunpack.c.h.b16 %v766
        %v954 = vunpack.c.l.b16 %v767
        %v955 = vunpack.c.h.b16 %v767
        %v956 = vunpack.c.l.b16 %v768
        %v957 = vunpack.c.h.b16 %v768
        %v958 = vunpack.c.l.b16 %v769
        %v959 = vunpack.c.h.b16 %v769
        %v960 = vunpack.c.l.b16 %v770
        %v961 = vunpack.c.h.b16 %v770
        %v962 = vunpack.c.l.b16 %v771
        %v963 = vunpack.c.h.b16 %v771
        %v964 = vpack.c.b16 %v838, %v836
        %v965 = vpack.c.b16 %v839, %v837
        %v966 = vpack.c.b16 %v842, %v840
        %v967 = vpack.c.b16 %v843, %v841
        %v968 = vpack.c.b16 %v846, %v844
        %v969 = vpack.c.b16 %v847, %v845
        %v970 = vpack.c.b16 %v850, %v848
        %v971 = vpack.c.b16 %v851, %v849
        %v972 = vpack.c.b16 %v854, %v852
        %v973 = vpack.c.b16 %v855, %v853
        %v974 = vpack.c.b16 %v858, %v856
        %v975 = vpack.c.b16 %v859, %v857
        %v976 = vpack.c.b16 %v862, %v860
        %v977 = vpack.c.b16 %v863, %v861
        %v978 = vpack.c.b16 %v866, %v864
        %v979 = vpack.c.b16 %v867, %v865
        %v980 = vpack.c.b16 %v870, %v868
        %v981 = vpack.c.b16 %v871, %v869
        %v982 = vpack.c.b16 %v874, %v872
        %v983 = vpack.c.b16 %v875, %v873
        %v984 = vpack.c.b16 %v878, %v876
        %v985 = vpack.c.b16 %v879, %v877
        %v986 = vpack.c.b16 %v882, %v880
        %v987 = vpack.c.b16 %v883, %v881
        %v988 = vpack.c.b16 %v886, %v884
        %v989 = vpack.c.b16 %v887, %v885
        %v990 = vpack.c.b16 %v890, %v888
        %v991 = vpack.c.b16 %v891, %v889
        %v992 = vpack.c.b16 %v894, %v892
        %v993 = vpack.c.b16 %v895, %v893
        %v994 = vpack.c.b16 %v898, %v896
        %v995 = vpack.c.b16 %v899, %v897
        %v996 = vpack.c.b16 %v902, %v900
        %v997 = vpack.c.b16 %v903, %v901
        %v998 = vpack.c.b16 %v906, %v904
        %v999 = vpack.c.b16 %v907, %v905
        %v1000 = vpack.c.b16 %v910, %v908
        %v1001 = vpack.c.b16 %v911, %v909
        %v1002 = vpack.c.b16 %v914, %v912
        %v1003 = vpack.c.b16 %v915, %v913
        %v1004 = vpack.c.b16 %v918, %v916
        %v1005 = vpack.c.b16 %v919, %v917
        %v1006 = vpack.c.b16 %v922, %v920
        %v1007 = vpack.c.b16 %v923, %v921
        %v1008 = vpack.c.b16 %v926, %v924
        %v1009 = vpack.c.b16 %v927, %v925
        %v1010 = vpack.c.b16 %v930, %v928
        %v1011 = vpack.c.b16 %v931, %v929
        %v1012 = vpack.c.b16 %v934, %v932
        %v1013 = vpack.c.b16 %v935, %v933
        %v1014 = vpack.c.b16 %v938, %v936
        %v1015 = vpack.c.b16 %v939, %v937
        %v1016 = vpack.c.b16 %v942, %v940
        %v1017 = vpack.c.b16 %v943, %v941
        %v1018 = vpack.c.b16 %v946, %v944
        %v1019 = vpack.c.b16 %v947, %v945
        %v1020 = vpack.c.b16 %v950, %v948
        %v1021 = vpack.c.b16 %v951, %v949
        %v1022 = vpack.c.b16 %v954, %v952
        %v1023 = vpack.c.b16 %v955, %v953
        %v1024 = vpack.c.b16 %v958, %v956
        %v1025 = vpack.c.b16 %v959, %v957
        %v1026 = vpack.c.b16 %v962, %v960
        %v1027 = vpack.c.b16 %v963, %v961
        %1092 = vmatpush.bf16.msra.mxu0 %v978
        %1093 = vmatpush.bf16.msra.mxu0 %v976
        %1094 = vmatpush.bf16.msra.mxu0 %v974
        %1095 = vmatpush.bf16.msra.mxu0 %v972
        %1096 = vmatpush.bf16.msra.mxu0 %v970
        %1097 = vmatpush.bf16.msra.mxu0 %v968
        %1098 = vmatpush.bf16.msra.mxu0 %v966
        %1099 = vmatpush.bf16.msra.mxu0 %v964
        %1100 = vmatmul.bf16.gmra.mxu0 %v704
        %v1101 = vpop.f32.mrf.mxu0
        %v1102 = vadd.f32 0.0, %v1101
        %v1103 = vpop.f32.mrf.mxu0
        %1104 = vdwg.mxu0
        %1105 = vmatpush.bf16.msra.mxu0 %v994
        %1106 = vmatpush.bf16.msra.mxu0 %v992
        %1107 = vmatpush.bf16.msra.mxu0 %v990
        %1108 = vmatpush.bf16.msra.mxu0 %v988
        %1109 = vmatpush.bf16.msra.mxu0 %v986
        %1110 = vmatpush.bf16.msra.mxu0 %v984
        %1111 = vmatpush.bf16.msra.mxu0 %v982
        %1112 = vmatpush.bf16.msra.mxu0 %v980
        %1113 = vmatmul.bf16.gmra.mxu0 %v705
        %v1114 = vpop.f32.mrf.mxu0
        %v1115 = vadd.f32 %v1102, %v1114
        %v1116 = vpop.f32.mrf.mxu0
        %1117 = vdwg.mxu0
        %1118 = vmatpush.bf16.msra.mxu0 %v1010
        %1119 = vmatpush.bf16.msra.mxu0 %v1008
        %1120 = vmatpush.bf16.msra.mxu0 %v1006
        %1121 = vmatpush.bf16.msra.mxu0 %v1004
        %1122 = vmatpush.bf16.msra.mxu0 %v1002
        %1123 = vmatpush.bf16.msra.mxu0 %v1000
        %1124 = vmatpush.bf16.msra.mxu0 %v998
        %1125 = vmatpush.bf16.msra.mxu0 %v996
        %1126 = vmatmul.bf16.gmra.mxu0 %v706
        %v1127 = vpop.f32.mrf.mxu0
        %v1128 = vadd.f32 %v1115, %v1127
        %v1129 = vpop.f32.mrf.mxu0
        %1130 = vdwg.mxu0
        %1131 = vmatpush.bf16.msra.mxu0 %v1026
        %1132 = vmatpush.bf16.msra.mxu0 %v1024
        %1133 = vmatpush.bf16.msra.mxu0 %v1022
        %1134 = vmatpush.bf16.msra.mxu0 %v1020
        %1135 = vmatpush.bf16.msra.mxu0 %v1018
        %1136 = vmatpush.bf16.msra.mxu0 %v1016
        %1137 = vmatpush.bf16.msra.mxu0 %v1014
        %1138 = vmatpush.bf16.msra.mxu0 %v1012
        %1139 = vmatmul.bf16.gmra.mxu0 %v707
        %v1140 = vpop.f32.mrf.mxu0
        %v1141 = vadd.f32 %v1128, %v1140
        %v1142 = vpop.f32.mrf.mxu0
        %1143 = vdwg.mxu0
        %1144 = vmatpush.bf16.msra.mxu0 %v979
        %1145 = vmatpush.bf16.msra.mxu0 %v977
        %1146 = vmatpush.bf16.msra.mxu0 %v975
        %1147 = vmatpush.bf16.msra.mxu0 %v973
        %1148 = vmatpush.bf16.msra.mxu0 %v971
        %1149 = vmatpush.bf16.msra.mxu0 %v969
        %1150 = vmatpush.bf16.msra.mxu0 %v967
        %1151 = vmatpush.bf16.msra.mxu0 %v965
        %1152 = vmatmul.bf16.gmra.mxu0 %v704
        %v1153 = vpop.f32.mrf.mxu0
        %v1154 = vadd.f32 0.0, %v1153
        %v1155 = vpop.f32.mrf.mxu0
        %1156 = vdwg.mxu0
        %1157 = vmatpush.bf16.msra.mxu0 %v995
        %1158 = vmatpush.bf16.msra.mxu0 %v993
        %1159 = vmatpush.bf16.msra.mxu0 %v991
        %1160 = vmatpush.bf16.msra.mxu0 %v989
        %1161 = vmatpush.bf16.msra.mxu0 %v987
        %1162 = vmatpush.bf16.msra.mxu0 %v985
        %1163 = vmatpush.bf16.msra.mxu0 %v983
        %1164 = vmatpush.bf16.msra.mxu0 %v981
        %1165 = vmatmul.bf16.gmra.mxu0 %v705
        %v1166 = vpop.f32.mrf.mxu0
        %v1167 = vadd.f32 %v1154, %v1166
        %v1168 = vpop.f32.mrf.mxu0
        %1169 = vdwg.mxu0
        %1170 = vmatpush.bf16.msra.mxu0 %v1011
        %1171 = vmatpush.bf16.msra.mxu0 %v1009
        %1172 = vmatpush.bf16.msra.mxu0 %v1007
        %1173 = vmatpush.bf16.msra.mxu0 %v1005
        %1174 = vmatpush.bf16.msra.mxu0 %v1003
        %1175 = vmatpush.bf16.msra.mxu0 %v1001
        %1176 = vmatpush.bf16.msra.mxu0 %v999
        %1177 = vmatpush.bf16.msra.mxu0 %v997
        %1178 = vmatmul.bf16.gmra.mxu0 %v706
        %v1179 = vpop.f32.mrf.mxu0
        %v1180 = vadd.f32 %v1167, %v1179
        %v1181 = vpop.f32.mrf.mxu0
        %1182 = vdwg.mxu0
        %1183 = vmatpush.bf16.msra.mxu0 %v1027
        %1184 = vmatpush.bf16.msra.mxu0 %v1025
        %1185 = vmatpush.bf16.msra.mxu0 %v1023
        %1186 = vmatpush.bf16.msra.mxu0 %v1021
        %1187 = vmatpush.bf16.msra.mxu0 %v1019
        %1188 = vmatpush.bf16.msra.mxu0 %v1017
        %1189 = vmatpush.bf16.msra.mxu0 %v1015
        %1190 = vmatpush.bf16.msra.mxu0 %v1013
        %1191 = vmatmul.bf16.gmra.mxu0 %v707
        %v1192 = vpop.f32.mrf.mxu0
        %v1193 = vadd.f32 %v1180, %v1192
        %v1194 = vpop.f32.mrf.mxu0
        %1195 = vdwg.mxu0
        %v1196 = vxor.u32 %v1141, 2147483648
        %v1197 = vxor.u32 %v1193, 2147483648
        %v1198 = vmul.f32 %v1196, 1.442695
        %v1199 = vpow.pop %v1198
        %v1200 = vmul.f32 %v1197, 1.442695
        %v1201 = vpow.pop %v1200
        %v1202 = vadd.f32 %v1199, 1.0
        %v1203 = vadd.f32 %v1201, 1.0
        %v1204 = vrcp.pop %v1202
        %v1205 = vmul.f32 %v1202, %v1204
        %v1206 = vsub.f32 1.0, %v1205
        %v1207 = vmul.f32 %v1204, %v1206
        %v1208 = vadd.f32 %v1204, %v1207
        %vm1209 = vweird.f32 %v1202
        %vm1210 = vweird.f32 %v1204
        %vm1211 = vmor %vm1209, %vm1210
        %v1212 = vsel %vm1211, %v1204, %v1208
        %v1213 = vand.u32 2147483647, %v1202
        %vm1214 = vcmp.eq.f32.partialorder %v1213, 8.507059e+37
        %v1215 = vand.u32 %v1202, 2147483648
        %v1216 = vor.u32 1.1754944e-38, %v1215
        %v1217 = vsel %vm1214, %v1216, %v1212
        %v1218 = vmul.f32 1.0, %v1217
        %v1219 = vrcp.pop %v1203
        %v1220 = vmul.f32 %v1203, %v1219
        %v1221 = vsub.f32 1.0, %v1220
        %v1222 = vmul.f32 %v1219, %v1221
        %v1223 = vadd.f32 %v1219, %v1222
        %vm1224 = vweird.f32 %v1203
        %vm1225 = vweird.f32 %v1219
        %vm1226 = vmor %vm1224, %vm1225
        %v1227 = vsel %vm1226, %v1219, %v1223
        %v1228 = vand.u32 2147483647, %v1203
        %vm1229 = vcmp.eq.f32.partialorder %v1228, 8.507059e+37
        %v1230 = vand.u32 %v1203, 2147483648
        %v1231 = vor.u32 1.1754944e-38, %v1230
        %v1232 = vsel %vm1229, %v1231, %v1227
        %v1233 = vmul.f32 1.0, %v1232
        %v1234 = vperm.slane %v1218, 0
        %v1235 = vperm.slane %v1233, 0
        %v1236 = vmul.f32 %v624, %v1234
        %v1237 = vmul.f32 %v625, %v1235
        %v1238 = vmul.f32 %v626, %v1234
        %v1239 = vmul.f32 %v627, %v1235
        %v1240 = vmul.f32 %v628, %v1234
        %v1241 = vmul.f32 %v629, %v1235
        %v1242 = vmul.f32 %v630, %v1234
        %v1243 = vmul.f32 %v631, %v1235
        %1244 = vst [vmem:[%s261] sm:$0xff] %v1236
        %1245 = vst [vmem:[%s261 + $0x8] sm:$0xff] %v1237
        %1246 = vst [vmem:[%s261 + $0x10] sm:$0xff] %v1238
        %1247 = vst [vmem:[%s261 + $0x18] sm:$0xff] %v1239
        %1248 = vst [vmem:[%s261 + $0x20] sm:$0xff] %v1240
        %1249 = vst [vmem:[%s261 + $0x28] sm:$0xff] %v1241
        %1250 = vst [vmem:[%s261 + $0x30] sm:$0xff] %v1242
        %1251 = vst [vmem:[%s261 + $0x38] sm:$0xff] %v1243
        %s1252 = sand.u32 %s160, 1
        %s1253 = scalar_lea.sflag [#allocation5], %s1252
        %s1254 = sand.u32 %s160, 1
        %s1255 = smul.addr %s1254, 64
        %s1256 = scalar_lea.vmem [#allocation6], %s1255
        // Predicated region
        $region49: #{tpu_custom_call.1} parent=43 // pred_check
          %p1257 = pneg %p170
        $region50: #{tpu_custom_call.1} parent=43 // pred_check_branch
          %1259 = sbr.rel (%p1257) target = $region52
        $region51: #{tpu_custom_call.1} parent=43 // pred_region
          %1261 = vsyncadd %s1253, 0
          %s1262 = smul.addr %s21, 8
          %s1263 = smul.addr %s1262, 8
          %s1264 = scalar_lea.hbm %s6, %s1263
          %s1265 = sshll.u32 %s1256, 4
          %s1266 = int_to_ptr.vmem [resolvable:$true] %s1265
          %s1267 = sshll.u32 %s1264, 4
          %s1268 = int_to_ptr.hbm [resolvable:$true] %s1267
          %1273 = dma.vmem_to_hbm [thread:$0]  %s1266, 1024, %s1268, %s1253, 256, 256, 16
        $region52: #{tpu_custom_call.1} parent=43 // pred_fallthru
          _
      $region44: #{tpu_custom_call.1} parent=5 // pred_fallthru
        _
      %p1274 = scmp.le.s32.totalorder 2, %s16
      // Predicated region
      $region53: #{tpu_custom_call.1} parent=5 // pred_check
        %p1275 = pneg %p1274
      $region54: #{tpu_custom_call.1} parent=5 // pred_check_branch
        %1277 = sbr.rel (%p1275) target = $region56
      $region55: #{tpu_custom_call.1} parent=5 // pred_region
        %s1278 = ssub.s32 %s16, 2
        // Predicated region
        $region57: #{tpu_custom_call.1} parent=55 // pred_check
          %p1279 = pneg %p176
        $region58: #{tpu_custom_call.1} parent=55 // pred_check_branch
          %1281 = sbr.rel (%p1279) target = $region60
        $region59: #{tpu_custom_call.1} parent=55 // pred_region
          %s1282 = sand.u32 %s161, 1
          %s1283 = scalar_lea.sflag [#allocation5], %s1282
          %s1284 = sand.u32 %s161, 1
          %s1285 = smul.addr %s1284, 64
          %s1286 = scalar_lea.vmem [#allocation6], %s1285
          %1288 = dma.done %s1283, 1024
        $region60: #{tpu_custom_call.1} parent=55 // pred_fallthru
          _
      $region56: #{tpu_custom_call.1} parent=5 // pred_fallthru
        _
    $region6: #{tpu_custom_call.1} parent=1 // loop_footer
      %s20 = sadd.s32 1, %s16
    $region7: #{tpu_custom_call.1} parent=1 // loop_footer_branch
      %15 = sbr.rel target = $region3
    $region8: #{tpu_custom_call.1} parent=1 // loop_exit
      _
    %1289 = vsyncpa [#allocation4], 1
    %s1290 = scalar_lea.sflag [#allocation4], 1
    %1291 = vsyncpa %s1290, 1
    %1292 = vsyncpa [#allocation5], 1
    %s1293 = scalar_lea.sflag [#allocation5], 1
    %1294 = vsyncpa %s1293, 1

</llo_original>
